<compile_context>
chip_gen: v7x
topology: tpu7x:2x2x1
jax: 0.10.0
libtpu: 0.0.40
codegen_flags: <defaults>
</compile_context>

<pallas_src>
import functools
import math

import jax
import jax.numpy as jnp
from jax.experimental import pallas as pl
from jax.experimental.pallas import tpu as pltpu


def _round_up(x, m):
    return ((x + m - 1) // m) * m


def _unified_contrastive_kernel(y_pred_ref, y_true_ref, out_ref,
                                sneg_ref, spos_ref, *,
                                exp_margin, n_total, tn, mask_cols,
                                binary_labels):
    j = pl.program_id(1)

    @pl.when(j == 0)
    def _init():
        sneg_ref[...] = jnp.zeros_like(sneg_ref)
        spos_ref[...] = jnp.zeros_like(spos_ref)

    yp = y_pred_ref[...].astype(jnp.float32)   # (TB, TN)
    yt = y_true_ref[...].astype(jnp.float32)   # (TB, TN)

    if binary_labels:
        # Single EUP exp per element: exp(-y_pred) where y_true==1,
        # exp(y_pred) where y_true==0; select with cheap VALU `where`s.
        is_pos = yt > 0.5
        ez = jnp.exp(jnp.where(is_pos, -yp, yp))
        pos_term = jnp.where(is_pos, ez, 0.0)
        neg_term = jnp.where(is_pos, 0.0, ez)
    else:
        # Soft-label fallback: exp + exact reciprocal (2 EUP ops / element).
        e = jnp.exp(yp)
        pos_term = yt * pl.reciprocal(e)
        neg_term = (1.0 - yt) * e

    if mask_cols:
        # Last column block is partial: zero out out-of-range lanes so the
        # padded garbage never enters the sums.
        col = jax.lax.broadcasted_iota(jnp.int32, yp.shape, 1) + j * tn
        valid = col < n_total
        pos_term = jnp.where(valid, pos_term, 0.0)
        neg_term = jnp.where(valid, neg_term, 0.0)

    spos_ref[...] += jnp.sum(pos_term, axis=1, keepdims=True)
    sneg_ref[...] += jnp.sum(neg_term, axis=1, keepdims=True)

    @pl.when(j == pl.num_programs(1) - 1)
    def _finalize():
        # exp(y_pred + margin) == exp(margin) * exp(y_pred); exp(margin) is a
        # compile-time scalar applied once per row here.
        out_ref[...] = jnp.log(1.0 + exp_margin * sneg_ref[...] * spos_ref[...])


def _device_block_budget():
    """(per-input block byte budget, vmem_limit_bytes or None) per TPU gen."""
    try:
        kind = jax.devices()[0].device_kind.lower()
    except Exception:
        kind = ""
    if "v7" in kind:
        # 2 inputs x 2 buffers x 6 MiB = 24 MiB; raise scoped limit (64 MiB phys).
        return 6 << 20, 48 << 20
    if "v6" in kind:
        # 16 MiB double-buffered fits the 32 MiB default scoped limit.
        return 4 << 20, None
    if "v5e" in kind or "v5 lite" in kind or "v5lite" in kind:
        # Default scoped limit is only 16 MiB on v5e; stay at ~12 MiB total.
        return 3 << 20, None
    return 2 << 20, None


def _pick_tiles(B, N, itemsizes, target_bytes):
    """Pick (row_tile, col_tile) obeying (8,128) tiling + dtype packing."""
    max_item = max(itemsizes)
    min_item = min(itemsizes)
    row_gran = max(8, 32 // min_item)          # f32: 8, bf16: 16, int8/fp8: 32
    tb_fit = (target_bytes // max(1, N * max_item)) // row_gran * row_gran
    if tb_fit >= row_gran:
        # Candidate axis stays whole: the dim=1 reduction never crosses blocks.
        tn = N
        tb = tb_fit
        if tb < B:
            # Keep >= ~8 row steps so pipelining + dual-TC sharding survive.
            tb = min(tb, max(row_gran, _round_up(pl.cdiv(B, 8), row_gran)))
        if tb >= B:
            tb = B
    else:
        # Very wide N: minimum-height row blocks, split lane axis in 128s.
        tb = B if B <= row_gran else row_gran
        tn = (target_bytes // max(1, tb * max_item)) // 128 * 128
        tn = max(128, tn)
        if tn >= N:
            tn = N
    return tb, tn


def unified_contrastive(y_pred, y_true, margin=0.0, reduction="mean",
                        binary_labels=True, block_rows=None, block_cols=None):
    """Pallas TPU implementation of UnifiedContrastive.forward.

    y_pred, y_true: (B, N) arrays, any float/int dtype (upcast to f32 in-kernel;
    passing y_true in a narrow dtype such as bf16/int8 from the producer halves
    or quarters its HBM traffic on this memory-bound op).
    binary_labels=True assumes y_true is multi-hot in {0, 1} (the UniMoCo
    contract) and uses a single-exp formulation; set False for soft labels.
    Returns a scalar for reduction='mean', otherwise a (B,) per-sample loss.
    """
    assert y_pred.shape == y_true.shape and y_pred.ndim == 2
    B, N = y_pred.shape

    itemsizes = (jnp.dtype(y_pred.dtype).itemsize, jnp.dtype(y_true.dtype).itemsize)
    target_bytes, vmem_limit = _device_block_budget()
    tb, tn = _pick_tiles(B, N, itemsizes, target_bytes)
    if block_rows is not None:                  # test/tuning override
        tb = min(block_rows, B)
    if block_cols is not None:
        tn = min(block_cols, N)

    grid = (pl.cdiv(B, tb), pl.cdiv(N, tn))
    mask_cols = (N % tn) != 0

    kernel = functools.partial(
        _unified_contrastive_kernel,
        exp_margin=float(math.exp(float(margin))),
        n_total=N, tn=tn, mask_cols=mask_cols, binary_labels=binary_labels,
    )

    bytes_in = B * N * sum(itemsizes)
    cost = pl.CostEstimate(
        flops=6 * B * N,
        transcendentals=(1 if binary_labels else 2) * B * N,
        bytes_accessed=bytes_in + B * 4,
    )

    per_row = pl.pallas_call(
        kernel,
        out_shape=jax.ShapeDtypeStruct((B, 1), jnp.float32),
        grid_spec=pltpu.PrefetchScalarGridSpec(
            num_scalar_prefetch=0,
            grid=grid,
            in_specs=[
                pl.BlockSpec((tb, tn), lambda i, j: (i, j)),
                pl.BlockSpec((tb, tn), lambda i, j: (i, j)),
            ],
            out_specs=pl.BlockSpec((tb, 1), lambda i, j: (i, 0)),
            scratch_shapes=[
                pltpu.VMEM((tb, 1), jnp.float32),   # sum_neg accumulator
                pltpu.VMEM((tb, 1), jnp.float32),   # sum_pos accumulator
            ],
        ),
        compiler_params=pltpu.CompilerParams(
            dimension_semantics=("parallel", "arbitrary"),
            vmem_limit_bytes=vmem_limit,
        ),
        cost_estimate=cost,
    )(y_pred, y_true)

    loss = per_row[:, 0]
    if reduction == "mean":
        # Tiny (B,) reduction in plain JAX; keeps the row grid axis "parallel".
        return jnp.mean(loss)
    return loss


def _reference(y_pred, y_true, margin=0.0, reduction="mean"):
    yp = y_pred.astype(jnp.float32)
    yt = y_true.astype(jnp.float32)
    sum_neg = jnp.sum((1.0 - yt) * jnp.exp(yp + margin), axis=1)
    sum_pos = jnp.sum(yt * jnp.exp(-yp), axis=1)
    loss = jnp.log(1.0 + sum_neg * sum_pos)
    return jnp.mean(loss) if reduction == "mean" else loss


if __name__ == "__main__":
    key = jax.random.PRNGKey(0)
    k1, k2, k3, k4, k5 = jax.random.split(key, 5)

    B, N = 8, 128
    y_pred = jax.random.normal(k1, (B, N), dtype=jnp.float32) * 0.5
    y_true = (jax.random.uniform(k2, (B, N)) < 0.1).astype(jnp.float32)

    # 1) mean reduction, f32
    out = jax.block_until_ready(
        unified_contrastive(y_pred, y_true, margin=0.0, reduction="mean"))
    ref = _reference(y_pred, y_true, margin=0.0, reduction="mean")
    assert jnp.allclose(out, ref, rtol=1e-5, atol=1e-5), (out, ref)

    # 2) 'none' reduction with margin
    out_vec = jax.block_until_ready(
        unified_contrastive(y_pred, y_true, margin=0.5, reduction="none"))
    ref_vec = _reference(y_pred, y_true, margin=0.5, reduction="none")
    assert jnp.allclose(out_vec, ref_vec, rtol=1e-5, atol=1e-5)

    # 3) Native bf16 inputs (in-register upcast, 16-row packing granularity)
    out_bf16 = jax.block_until_ready(
        unified_contrastive(y_pred.astype(jnp.bfloat16), y_true.astype(jnp.bfloat16),
                            margin=0.0, reduction="mean"))
    ref_bf16 = _reference(y_pred.astype(jnp.bfloat16), y_true.astype(jnp.bfloat16),
                          margin=0.0, reduction="mean")
    assert jnp.allclose(out_bf16, ref_bf16, rtol=2e-2, atol=2e-2), (out_bf16, ref_bf16)

    # 4) Mixed dtypes: f32 logits, narrow bf16 multi-hot labels
    out_mix = jax.block_until_ready(
        unified_contrastive(y_pred, y_true.astype(jnp.bfloat16),
                            margin=0.25, reduction="mean"))
    ref_mix = _reference(y_pred, y_true, margin=0.25, reduction="mean")
    assert jnp.allclose(out_mix, ref_mix, rtol=1e-4, atol=1e-4), (out_mix, ref_mix)

    # 5) Forced N-split (multi-block reduction + partial-last-block masking)
    B2, N2 = 16, 320
    yp2 = jax.random.normal(k3, (B2, N2), dtype=jnp.float32) * 0.5
    yt2 = (jax.random.uniform(k4, (B2, N2)) < 0.1).astype(jnp.float32)
    out_split = jax.block_until_ready(
        unified_contrastive(yp2, yt2, margin=0.25, reduction="none",
                            block_rows=8, block_cols=128))
    ref_split = _reference(yp2, yt2, margin=0.25, reduction="none")
    assert jnp.allclose(out_split, ref_split, rtol=1e-5, atol=1e-5)

    # 6) Soft-label fallback path (exp + reciprocal)
    yt_soft = jax.random.uniform(k5, (B, N), dtype=jnp.float32)
    out_soft = jax.block_until_ready(
        unified_contrastive(y_pred, yt_soft, margin=0.0, reduction="mean",
                            binary_labels=False))
    ref_soft = _reference(y_pred, yt_soft, margin=0.0, reduction="mean")
    assert jnp.allclose(out_soft, ref_soft, rtol=1e-5, atol=1e-5), (out_soft, ref_soft)

    print("KERNEL_OK")
</pallas_src>

<mosaic_0001>
module attributes {stable_mosaic.version = 11 : i64} {
  func.func @_unified_contrastive_kernel(%arg0: i32, %arg1: i32, %arg2: memref<8x128xf32, #tpu.memory_space<vmem>>, %arg3: memref<8x128xf32, #tpu.memory_space<vmem>>, %arg4: memref<8x1xf32, #tpu.memory_space<vmem>>, %arg5: memref<8x1xf32, #tpu.memory_space<vmem>>, %arg6: memref<8x1xf32, #tpu.memory_space<vmem>>) attributes {dimension_semantics = [#tpu.dimension_semantics<parallel>, #tpu.dimension_semantics<arbitrary>], iteration_bounds = array<i64: 1, 1>, scalar_prefetch = 0 : i64, scratch_operands = 2 : i64, tpu.core_type = #tpu.core_type<tc>, window_params = [{transform_indices = @transform_0, window_bounds = array<i64: 8, 128>}, {transform_indices = @transform_1, window_bounds = array<i64: 8, 128>}, {transform_indices = @transform_2, window_bounds = array<i64: 8, 1>}]} {
    %c0_i32 = arith.constant 0 : i32
    %0 = arith.cmpi eq, %arg1, %c0_i32 : i32
    %1 = arith.extui %0 : i1 to i32
    %c0_i32_0 = arith.constant 0 : i32
    %2 = arith.cmpi ne, %1, %c0_i32_0 : i32
    scf.if %2 {
      %cst_19 = arith.constant 0.000000e+00 : f32
      %28 = vector.broadcast %cst_19 : f32 to vector<8x1xf32>
      %c0_20 = arith.constant 0 : index
      %c0_21 = arith.constant 0 : index
      %29 = vector.load %arg5[%c0_20, %c0_21] : memref<8x1xf32, #tpu.memory_space<vmem>>, vector<8x1xf32>
      tpu.vector_store %arg5[%c0_20, %c0_21], %28 {strides = array<i32>} : memref<8x1xf32, #tpu.memory_space<vmem>>, vector<8x1xf32>,
      %cst_22 = arith.constant 0.000000e+00 : f32
      %30 = vector.broadcast %cst_22 : f32 to vector<8x1xf32>
      %c0_23 = arith.constant 0 : index
      %c0_24 = arith.constant 0 : index
      %31 = vector.load %arg6[%c0_23, %c0_24] : memref<8x1xf32, #tpu.memory_space<vmem>>, vector<8x1xf32>
      tpu.vector_store %arg6[%c0_23, %c0_24], %30 {strides = array<i32>} : memref<8x1xf32, #tpu.memory_space<vmem>>, vector<8x1xf32>,
    } else {
    }
    %c0 = arith.constant 0 : index
    %c0_1 = arith.constant 0 : index
    %3 = vector.load %arg2[%c0, %c0_1] : memref<8x128xf32, #tpu.memory_space<vmem>>, vector<8x128xf32>
    %c0_2 = arith.constant 0 : index
    %c0_3 = arith.constant 0 : index
    %4 = vector.load %arg3[%c0_2, %c0_3] : memref<8x128xf32, #tpu.memory_space<vmem>>, vector<8x128xf32>
    %cst = arith.constant 5.000000e-01 : f32
    %5 = vector.broadcast %cst : f32 to vector<8x128xf32>
    %6 = arith.cmpf ogt, %4, %5 : vector<8x128xf32>
    %cst_4 = arith.constant 0.000000e+00 : f32
    %7 = vector.broadcast %cst_4 : f32 to vector<8x128xf32>
    %8 = arith.subf %7, %3 : vector<8x128xf32>
    %9 = arith.select %6, %8, %3 : vector<8x128xi1>, vector<8x128xf32>
    %10 = math.exp %9 : vector<8x128xf32>
    %cst_5 = arith.constant 0.000000e+00 : f32
    %11 = vector.broadcast %cst_5 : f32 to vector<8x128xf32>
    %12 = arith.select %6, %10, %11 : vector<8x128xi1>, vector<8x128xf32>
    %cst_6 = arith.constant 0.000000e+00 : f32
    %13 = vector.broadcast %cst_6 : f32 to vector<8x128xf32>
    %14 = arith.select %6, %13, %10 : vector<8x128xi1>, vector<8x128xf32>
    %c0_7 = arith.constant 0 : index
    %c0_8 = arith.constant 0 : index
    %15 = vector.load %arg6[%c0_7, %c0_8] : memref<8x1xf32, #tpu.memory_space<vmem>>, vector<8x1xf32>
    %cst_9 = arith.constant dense<0.000000e+00> : vector<8xf32>
    %16 = vector.multi_reduction <add>, %12, %cst_9 [1] : vector<8x128xf32> to vector<8xf32>
    %17 = vector.shape_cast %16 : vector<8xf32> to vector<8x1xf32>
    %18 = arith.addf %15, %17 : vector<8x1xf32>
    %c0_10 = arith.constant 0 : index
    %c0_11 = arith.constant 0 : index
    %19 = vector.load %arg6[%c0_10, %c0_11] : memref<8x1xf32, #tpu.memory_space<vmem>>, vector<8x1xf32>
    tpu.vector_store %arg6[%c0_10, %c0_11], %18 {strides = array<i32>} : memref<8x1xf32, #tpu.memory_space<vmem>>, vector<8x1xf32>,
    %c0_12 = arith.constant 0 : index
    %c0_13 = arith.constant 0 : index
    %20 = vector.load %arg5[%c0_12, %c0_13] : memref<8x1xf32, #tpu.memory_space<vmem>>, vector<8x1xf32>
    %cst_14 = arith.constant dense<0.000000e+00> : vector<8xf32>
    %21 = vector.multi_reduction <add>, %14, %cst_14 [1] : vector<8x128xf32> to vector<8xf32>
    %22 = vector.shape_cast %21 : vector<8xf32> to vector<8x1xf32>
    %23 = arith.addf %20, %22 : vector<8x1xf32>
    %c0_15 = arith.constant 0 : index
    %c0_16 = arith.constant 0 : index
    %24 = vector.load %arg5[%c0_15, %c0_16] : memref<8x1xf32, #tpu.memory_space<vmem>>, vector<8x1xf32>
    tpu.vector_store %arg5[%c0_15, %c0_16], %23 {strides = array<i32>} : memref<8x1xf32, #tpu.memory_space<vmem>>, vector<8x1xf32>,
    %c0_i32_17 = arith.constant 0 : i32
    %25 = arith.cmpi eq, %arg1, %c0_i32_17 : i32
    %26 = arith.extui %25 : i1 to i32
    %c0_i32_18 = arith.constant 0 : i32
    %27 = arith.cmpi ne, %26, %c0_i32_18 : i32
    scf.if %27 {
      %c0_19 = arith.constant 0 : index
      %c0_20 = arith.constant 0 : index
      %28 = vector.load %arg5[%c0_19, %c0_20] : memref<8x1xf32, #tpu.memory_space<vmem>>, vector<8x1xf32>
      %cst_21 = arith.constant 1.000000e+00 : f32
      %29 = vector.broadcast %cst_21 : f32 to vector<8x1xf32>
      %30 = arith.mulf %29, %28 : vector<8x1xf32>
      %c0_22 = arith.constant 0 : index
      %c0_23 = arith.constant 0 : index
      %31 = vector.load %arg6[%c0_22, %c0_23] : memref<8x1xf32, #tpu.memory_space<vmem>>, vector<8x1xf32>
      %32 = arith.mulf %30, %31 : vector<8x1xf32>
      %cst_24 = arith.constant 1.000000e+00 : f32
      %33 = vector.broadcast %cst_24 : f32 to vector<8x1xf32>
      %34 = arith.addf %33, %32 : vector<8x1xf32>
      %35 = math.log %34 : vector<8x1xf32>
      %c0_25 = arith.constant 0 : index
      %c0_26 = arith.constant 0 : index
      %36 = vector.load %arg4[%c0_25, %c0_26] : memref<8x1xf32, #tpu.memory_space<vmem>>, vector<8x1xf32>
      tpu.vector_store %arg4[%c0_25, %c0_26], %35 {strides = array<i32>} : memref<8x1xf32, #tpu.memory_space<vmem>>, vector<8x1xf32>,
    } else {
    }
    return
  }
  func.func @transform_0(%arg0: i32, %arg1: i32) -> (i32, i32) {
    %c0_i32 = arith.constant 0 : i32
    return %arg0, %arg1 : i32, i32
  }
  func.func @transform_1(%arg0: i32, %arg1: i32) -> (i32, i32) {
    %c0_i32 = arith.constant 0 : i32
    return %arg0, %arg1 : i32, i32
  }
  func.func @transform_2(%arg0: i32, %arg1: i32) -> (i32, i32) {
    %c0_i32 = arith.constant 0 : i32
    %c0_i32_0 = arith.constant 0 : i32
    return %arg0, %c0_i32 : i32, i32
  }
}

</mosaic_0001>

<llo_original>
// kernel: tpu_custom_call.1
$region0: #{tpu_custom_call.1}
  #allocation0 [shape = 'u32[]', space=smem, size = 0x4, offset = 0x4, fixed_abs, tag = 'smem constant byte address 0x4 - core index']
  #allocation1 [shape = 'u32[144,128]{1,0:T(1,128)}', space=vmem, size = 0x12000, scoped, tag = 'internal scratch']
  #allocation2 [shape = 'f32[8,1]{1,0:T(8,128)}', space=vmem, size = 0x1000, scoped, tag = 'scratch operand']
  #allocation3 [shape = 'f32[8,1]{1,0:T(8,128)}', space=vmem, size = 0x1000, scoped, tag = 'scratch operand']
  %s0 = inlined_call_operand.hbm [shape: f32[8,128], index: 0, kind: input, shape index: {}]
  %s1 = inlined_call_operand.hbm [shape: f32[8,128], index: 1, kind: input, shape index: {}]
  %s2 = inlined_call_operand.vmem [shape: f32[8,1], index: 2, kind: output, shape index: {}]
  %s3 = sld [smem:[#allocation0]]
  $region34: #{tpu_custom_call.1} parent=0
    _
  %s5 = ssub.s32 1, %s3
  %s6 = scalar_select 0, %s5, %s3
  $region1: #{tpu_custom_call.1} parent=0
    #allocation4 [shape = 'u8[4096]{0}', space=vmem, size = 0x1000, scoped, tag = 'input window, operand 0, single buffered']
    #allocation5 [shape = 's32[1]{0}', space=sflag, size = 0x4, scoped, tag = 'scoped memory for tpu_custom_call.1']
    #allocation6 [shape = 'u8[4096]{0}', space=vmem, size = 0x1000, scoped, tag = 'input window, operand 1, single buffered']
    #allocation7 [shape = 's32[1]{0}', space=sflag, size = 0x4, scoped, tag = 'scoped memory for tpu_custom_call.1']
    %7 = vsyncpa [#allocation5], 0
    %8 = vsyncpa [#allocation7], 0
    // Predicated region
    $region2: #{tpu_custom_call.1} parent=1 // pred_check
      _
    $region3: #{tpu_custom_call.1} parent=1 // pred_check_branch
      %10 = sbr.rel (0) target = $region5
    $region4: #{tpu_custom_call.1} parent=1 // pred_region
      %s12 = ssub.s32 128, 128
      %13 = vsyncadd [#allocation5], %s12
      %s15 = sshll.u32 [#allocation4], 4
      %s16 = int_to_ptr.vmem [resolvable:$true] %s15
      %18 = dma.hbm_to_vmem [thread:$0]  %s0, 128, %s16, [#allocation5]
    $region5: #{tpu_custom_call.1} parent=1 // pred_fallthru
      _
    // Predicated region
    $region6: #{tpu_custom_call.1} parent=1 // pred_check
      _
    $region7: #{tpu_custom_call.1} parent=1 // pred_check_branch
      %20 = sbr.rel (0) target = $region9
    $region8: #{tpu_custom_call.1} parent=1 // pred_region
      %s22 = ssub.s32 128, 128
      %23 = vsyncadd [#allocation7], %s22
      %s25 = sshll.u32 [#allocation6], 4
      %s26 = int_to_ptr.vmem [resolvable:$true] %s25
      %28 = dma.hbm_to_vmem [thread:$0]  %s1, 128, %s26, [#allocation7]
    $region9: #{tpu_custom_call.1} parent=1 // pred_fallthru
      _
    // Predicated region
    $region10: #{tpu_custom_call.1} parent=1 // pred_check
      _
    $region11: #{tpu_custom_call.1} parent=1 // pred_check_branch
      %30 = sbr.rel (0) target = $region13
    $region12: #{tpu_custom_call.1} parent=1 // pred_region
      %31 = dma.done [#allocation5], 128
    $region13: #{tpu_custom_call.1} parent=1 // pred_fallthru
      _
    // Predicated region
    $region14: #{tpu_custom_call.1} parent=1 // pred_check
      _
    $region15: #{tpu_custom_call.1} parent=1 // pred_check_branch
      %33 = sbr.rel (0) target = $region17
    $region16: #{tpu_custom_call.1} parent=1 // pred_region
      %34 = dma.done [#allocation7], 128
    $region17: #{tpu_custom_call.1} parent=1 // pred_fallthru
      _
    %p35 = scmp.eq.s32.totalorder 0, 0
    // Predicated region
    $region18: #{tpu_custom_call.1} parent=1 // pred_check
      %p36 = pneg %p35
    $region19: #{tpu_custom_call.1} parent=1 // pred_check_branch
      %38 = sbr.rel (%p36) target = $region21
    $region20: #{tpu_custom_call.1} parent=1 // pred_region
      %vm39 = vcmask 7168
      %40 = vst.msk [vmem:[#allocation2] sm:$0xff] %vm39, 0.0
      %41 = vst.msk [vmem:[#allocation3] sm:$0xff] %vm39, 0.0
    $region21: #{tpu_custom_call.1} parent=1 // pred_fallthru
      _
    %v42 = vld [vmem:[#allocation4] sm:$0xff]
    %v43 = vld [vmem:[#allocation6] sm:$0xff]
    %vm44 = vcmp.gt.f32.partialorder %v43, 0.5
    %v45 = vsub.f32 0.0, %v42
    %v46 = vsel %vm44, %v45, %v42
    %v47 = vmul.f32 %v46, 1.442695
    %v48 = vpow.pop %v47
    %v49 = vsel %vm44, %v48, 0.0
    %v50 = vsel %vm44, 0.0, %v48
    %v51 = vld [vmem:[#allocation3] sm:$0xff]
    %52 = vadd.xlane.f32.xlu0 %v49
    %v53 = vpop.xlane.xlu0 %52
    %v54 = vadd.f32 %v51, %v53
    %vm55 = vcmask 7168
    %56 = vst.msk [vmem:[#allocation3] sm:$0xff] %vm55, %v54
    %v57 = vld [vmem:[#allocation2] sm:$0xff]
    %58 = vadd.xlane.f32.xlu0 %v50
    %v59 = vpop.xlane.xlu0 %58
    %v60 = vadd.f32 %v57, %v59
    %61 = vst.msk [vmem:[#allocation2] sm:$0xff] %vm55, %v60
    // Predicated region
    $region22: #{tpu_custom_call.1} parent=1 // pred_check
      %p62 = pneg %p35
    $region23: #{tpu_custom_call.1} parent=1 // pred_check_branch
      %64 = sbr.rel (%p62) target = $region25
    $region24: #{tpu_custom_call.1} parent=1 // pred_region
      %v65 = vld [vmem:[#allocation2] sm:$0xff]
      %v66 = vld [vmem:[#allocation3] sm:$0xff]
      %v67 = vmul.f32 %v65, %v66
      %v68 = vadd.f32 %v67, 1.0
      %v69 = vlog2.pop %v68
      %v70 = vmul.f32 %v69, 0.6931472
      %71 = vst.msk [vmem:[%s2] sm:$0xff] %vm55, %v70
    $region25: #{tpu_custom_call.1} parent=1 // pred_fallthru
      _
    // Predicated region
    $region26: #{tpu_custom_call.1} parent=1 // pred_check
      _
    $region27: #{tpu_custom_call.1} parent=1 // pred_check_branch
      %73 = sbr.rel (0) target = $region29
    $region28: #{tpu_custom_call.1} parent=1 // pred_region
      _
    $region29: #{tpu_custom_call.1} parent=1 // pred_fallthru
      _
    // Predicated region
    $region30: #{tpu_custom_call.1} parent=1 // pred_check
      _
    $region31: #{tpu_custom_call.1} parent=1 // pred_check_branch
      %75 = sbr.rel (0) target = $region33
    $region32: #{tpu_custom_call.1} parent=1 // pred_region
      _
    $region33: #{tpu_custom_call.1} parent=1 // pred_fallthru
      _
    %76 = vsyncpa [#allocation5], 1
    %77 = vsyncpa [#allocation7], 1

</llo_original>
